<compile_context>
chip_gen: v6e
topology: v6e:2x2x1
jax: 0.10.0
libtpu: 0.0.40
codegen_flags: <defaults>
</compile_context>

<pallas_src>
import jax
import jax.numpy as jnp
from jax import lax
from jax.experimental import pallas as pl
from jax.experimental.pallas import tpu as pltpu

# Contract over the trailing axis of both operands, i.e. y = a @ b.T without
# materializing a transpose (matches torch F.linear's (out, in) weight layout).
_DN = (((1,), (1,)), ((), ()))


def mlp_kernel(x_ref, w1_ref, w3_ref, w2_ref, o_ref, acc_ref):
    """One (row-tile, inter-tile) step of the fused SwiGLU MLP.

    x_ref  : (tm, dim)  bf16   row tile of activations (resident across n)
    w1_ref : (tn, dim)  bf16   w1 slice (PyTorch layout: out, in)
    w3_ref : (tn, dim)  bf16   w3 slice
    w2_ref : (dim, tn)  bf16   w2 slice (PyTorch layout: out, in)
    o_ref  : (tm, dim)  bf16   output row tile
    acc_ref: (tm, dim)  f32    VMEM accumulator (resident across inter axis)
    """
    n = pl.program_id(1)

    @pl.when(n == 0)
    def _():
        acc_ref[...] = jnp.zeros_like(acc_ref)

    x = x_ref[...]
    # Gate / up projections on the MXU, f32 accumulation.
    h1 = lax.dot_general(x, w1_ref[...], _DN, preferred_element_type=jnp.float32)
    h3 = lax.dot_general(x, w3_ref[...], _DN, preferred_element_type=jnp.float32)
    # SwiGLU in f32 (VPU mul + EUP sigmoid — both off the MXU critical path).
    h = (h1 * jax.nn.sigmoid(h1)) * h3
    # Partial down projection over this inter_dim slice; accumulate in f32.
    acc_ref[...] += lax.dot_general(
        h.astype(w2_ref.dtype), w2_ref[...], _DN,
        preferred_element_type=jnp.float32)

    @pl.when(n == pl.num_programs(1) - 1)
    def _():
        o_ref[...] = acc_ref[...].astype(o_ref.dtype)


def _vmem_estimate(tm, tn, dim, w_bytes=2, x_bytes=2):
    """Approximate per-call VMEM footprint (double-buffered blocks + f32 acc)."""
    blocks = 2 * (tm * dim * x_bytes          # x tile
                  + 2 * tn * dim * w_bytes    # w1, w3 slices
                  + dim * tn * w_bytes        # w2 slice
                  + tm * dim * x_bytes)       # out tile
    acc = tm * dim * 4
    return blocks + acc


def _pick_tiles(M, dim, inter_dim, vmem_cap):
    """Choose (tm, tn): as large as fits ~80% of VMEM, lane/sublane friendly."""
    budget = int(vmem_cap * 0.8)
    tn_candidates = [c for c in (512, 384, 256, 128) if inter_dim % c == 0]
    if not tn_candidates:
        tn_candidates = [inter_dim]  # small model: take the whole inter dim
    for tm in (256, 128, 64, 32, 16):
        tm_eff = min(tm, M)
        for tn in tn_candidates:
            if _vmem_estimate(tm_eff, tn, dim) <= budget:
                return tm_eff, tn
    return min(16, M), tn_candidates[-1]


def mlp_forward(x, w1, w2, w3):
    """x: (B, S, dim) bf16; w1,w3: (inter_dim, dim); w2: (dim, inter_dim).

    Mirrors torch: w2(F.silu(w1(x)) * w3(x)) with F.linear semantics
    (y = x @ W.T, no bias). world_size == 1, so the parallel Linear variants
    reduce to plain Linear (no all_reduce).
    """
    B, S, dim = x.shape
    inter_dim = w1.shape[0]
    M = B * S
    x2d = x.reshape(M, dim)

    try:
        vmem_cap = pltpu.get_tpu_info().vmem_capacity_bytes
    except Exception:
        vmem_cap = 64 * 1024 * 1024  # conservative (v7x per-TC VMEM)

    tm, tn = _pick_tiles(M, dim, inter_dim, vmem_cap)
    num_m = pl.cdiv(M, tm)
    num_n = inter_dim // tn
    grid = (num_m, num_n)

    # Pad the row axis so every block is fully in-bounds (cheap: activations
    # are tiny compared to the streamed weights).
    M_pad = int(num_m) * tm
    if M_pad != M:
        x2d = jnp.pad(x2d, ((0, M_pad - M), (0, 0)))

    need = _vmem_estimate(tm, tn, dim)
    vmem_limit = min(max(need + (4 << 20), 32 << 20), int(vmem_cap * 0.9))

    cost = pl.CostEstimate(
        flops=6 * M * dim * inter_dim,          # three matmuls, 2 flops/MAC
        transcendentals=M * inter_dim,          # sigmoid (exp) per gate element
        bytes_accessed=(M * dim * x.dtype.itemsize
                        + int(num_m) * (w1.size + w2.size + w3.size) * 2
                        + M * dim * x.dtype.itemsize),
    )

    out2d = pl.pallas_call(
        mlp_kernel,
        out_shape=jax.ShapeDtypeStruct((M_pad, dim), x.dtype),
        grid_spec=pltpu.PrefetchScalarGridSpec(
            num_scalar_prefetch=0,
            grid=grid,
            in_specs=[
                pl.BlockSpec((tm, dim), lambda i, n: (i, 0)),   # x row tile
                pl.BlockSpec((tn, dim), lambda i, n: (n, 0)),   # w1 slice (streamed)
                pl.BlockSpec((tn, dim), lambda i, n: (n, 0)),   # w3 slice (streamed)
                pl.BlockSpec((dim, tn), lambda i, n: (0, n)),   # w2 slice (streamed)
            ],
            out_specs=pl.BlockSpec((tm, dim), lambda i, n: (i, 0)),
            scratch_shapes=[pltpu.VMEM((tm, dim), jnp.float32)],  # f32 accumulator
        ),
        compiler_params=pltpu.CompilerParams(
            dimension_semantics=("parallel", "arbitrary"),
            vmem_limit_bytes=int(vmem_limit)),
        cost_estimate=cost,
    )(x2d, w1, w3, w2)

    if M_pad != M:
        out2d = out2d[:M]
    return out2d.reshape(B, S, dim)


def reference_mlp(x, w1, w2, w3):
    """Pure-JAX reference matching the torch forward."""
    xf = x.astype(jnp.float32)
    h1 = xf @ w1.astype(jnp.float32).T
    h3 = xf @ w3.astype(jnp.float32).T
    h = jax.nn.silu(h1) * h3
    y = h @ w2.astype(jnp.float32).T
    return y.astype(x.dtype)


if __name__ == "__main__":
    # Small shapes consistent with the module: x is [batch, seq, dim]
    B, S, dim, inter_dim = 2, 8, 32, 64

    key = jax.random.PRNGKey(0)
    kx, k1, k2, k3 = jax.random.split(key, 4)

    # Deterministic parameter init (Linear.dtype = bfloat16, no bias),
    # PyTorch weight layout: (out_features, in_features).
    x = (jax.random.normal(kx, (B, S, dim), dtype=jnp.float32)
         .astype(jnp.bfloat16))
    w1 = (jax.random.normal(k1, (inter_dim, dim), dtype=jnp.float32) * 0.05
          ).astype(jnp.bfloat16)   # ColumnParallelLinear(dim, inter_dim)
    w2 = (jax.random.normal(k2, (dim, inter_dim), dtype=jnp.float32) * 0.05
          ).astype(jnp.bfloat16)   # RowParallelLinear(inter_dim, dim)
    w3 = (jax.random.normal(k3, (inter_dim, dim), dtype=jnp.float32) * 0.05
          ).astype(jnp.bfloat16)   # ColumnParallelLinear(dim, inter_dim)

    y = mlp_forward(x, w1, w2, w3)
    jax.block_until_ready(y)

    # Sanity check against pure-JAX reference (bf16 tolerance).
    y_ref = reference_mlp(x, w1, w2, w3)
    err = jnp.max(jnp.abs(y.astype(jnp.float32) - y_ref.astype(jnp.float32)))
    assert y.shape == (B, S, dim) and y.dtype == jnp.bfloat16
    assert float(err) < 2e-2, f"mismatch vs reference: {float(err)}"

    print("KERNEL_OK")
</pallas_src>

<mosaic_0001>
module attributes {stable_mosaic.version = 11 : i64} {
  func.func @mlp_kernel(%arg0: i32, %arg1: i32, %arg2: memref<16x32xbf16, #tpu.memory_space<vmem>>, %arg3: memref<64x32xbf16, #tpu.memory_space<vmem>>, %arg4: memref<64x32xbf16, #tpu.memory_space<vmem>>, %arg5: memref<32x64xbf16, #tpu.memory_space<vmem>>, %arg6: memref<16x32xbf16, #tpu.memory_space<vmem>>, %arg7: memref<16x32xf32, #tpu.memory_space<vmem>>) attributes {dimension_semantics = [#tpu.dimension_semantics<parallel>, #tpu.dimension_semantics<arbitrary>], iteration_bounds = array<i64: 1, 1>, scalar_prefetch = 0 : i64, scratch_operands = 1 : i64, tpu.core_type = #tpu.core_type<tc>, window_params = [{transform_indices = @transform_0, window_bounds = array<i64: 16, 32>}, {transform_indices = @transform_1, window_bounds = array<i64: 64, 32>}, {transform_indices = @transform_2, window_bounds = array<i64: 64, 32>}, {transform_indices = @transform_3, window_bounds = array<i64: 32, 64>}, {transform_indices = @transform_4, window_bounds = array<i64: 16, 32>}]} {
    %c0_i32 = arith.constant 0 : i32
    %0 = arith.cmpi eq, %arg1, %c0_i32 : i32
    %1 = arith.extui %0 : i1 to i32
    %c0_i32_0 = arith.constant 0 : i32
    %2 = arith.cmpi ne, %1, %c0_i32_0 : i32
    scf.if %2 {
      %cst_17 = arith.constant 0.000000e+00 : f32
      %24 = vector.broadcast %cst_17 : f32 to vector<16x32xf32>
      %c0_18 = arith.constant 0 : index
      %c0_19 = arith.constant 0 : index
      %25 = vector.load %arg7[%c0_18, %c0_19] : memref<16x32xf32, #tpu.memory_space<vmem>>, vector<16x32xf32>
      tpu.vector_store %arg7[%c0_18, %c0_19], %24 {strides = array<i32>} : memref<16x32xf32, #tpu.memory_space<vmem>>, vector<16x32xf32>,
    } else {
    }
    %c0 = arith.constant 0 : index
    %c0_1 = arith.constant 0 : index
    %3 = vector.load %arg2[%c0, %c0_1] : memref<16x32xbf16, #tpu.memory_space<vmem>>, vector<16x32xbf16>
    %c0_2 = arith.constant 0 : index
    %c0_3 = arith.constant 0 : index
    %4 = vector.load %arg3[%c0_2, %c0_3] : memref<64x32xbf16, #tpu.memory_space<vmem>>, vector<64x32xbf16>
    %cst = arith.constant dense<0.000000e+00> : vector<16x64xf32>
    %5 = tpu.matmul %3, %4, %cst {dimension_numbers = #tpu.dot_dimension_numbers<[1], [1], [0], [0], [0, 0, 1, 0], [], []>} : vector<16x32xbf16>, vector<64x32xbf16>, vector<16x64xf32> -> vector<16x64xf32>
    %c0_4 = arith.constant 0 : index
    %c0_5 = arith.constant 0 : index
    %6 = vector.load %arg4[%c0_4, %c0_5] : memref<64x32xbf16, #tpu.memory_space<vmem>>, vector<64x32xbf16>
    %cst_6 = arith.constant dense<0.000000e+00> : vector<16x64xf32>
    %7 = tpu.matmul %3, %6, %cst_6 {dimension_numbers = #tpu.dot_dimension_numbers<[1], [1], [0], [0], [0, 0, 1, 0], [], []>} : vector<16x32xbf16>, vector<64x32xbf16>, vector<16x64xf32> -> vector<16x64xf32>
    %8 = arith.negf %5 : vector<16x64xf32>
    %9 = math.exp %8 : vector<16x64xf32>
    %cst_7 = arith.constant 1.000000e+00 : f32
    %10 = vector.broadcast %cst_7 : f32 to vector<16x64xf32>
    %11 = arith.addf %10, %9 : vector<16x64xf32>
    %12 = arith.divf %10, %11 : vector<16x64xf32>
    %13 = arith.mulf %5, %12 : vector<16x64xf32>
    %14 = arith.mulf %13, %7 : vector<16x64xf32>
    %c0_8 = arith.constant 0 : index
    %c0_9 = arith.constant 0 : index
    %15 = vector.load %arg7[%c0_8, %c0_9] : memref<16x32xf32, #tpu.memory_space<vmem>>, vector<16x32xf32>
    %16 = arith.truncf %14 : vector<16x64xf32> to vector<16x64xbf16>
    %c0_10 = arith.constant 0 : index
    %c0_11 = arith.constant 0 : index
    %17 = vector.load %arg5[%c0_10, %c0_11] : memref<32x64xbf16, #tpu.memory_space<vmem>>, vector<32x64xbf16>
    %cst_12 = arith.constant dense<0.000000e+00> : vector<16x32xf32>
    %18 = tpu.matmul %16, %17, %cst_12 {dimension_numbers = #tpu.dot_dimension_numbers<[1], [1], [0], [0], [0, 0, 1, 0], [], []>} : vector<16x64xbf16>, vector<32x64xbf16>, vector<16x32xf32> -> vector<16x32xf32>
    %19 = arith.addf %15, %18 : vector<16x32xf32>
    %c0_13 = arith.constant 0 : index
    %c0_14 = arith.constant 0 : index
    %20 = vector.load %arg7[%c0_13, %c0_14] : memref<16x32xf32, #tpu.memory_space<vmem>>, vector<16x32xf32>
    tpu.vector_store %arg7[%c0_13, %c0_14], %19 {strides = array<i32>} : memref<16x32xf32, #tpu.memory_space<vmem>>, vector<16x32xf32>,
    %c0_i32_15 = arith.constant 0 : i32
    %21 = arith.cmpi eq, %arg1, %c0_i32_15 : i32
    %22 = arith.extui %21 : i1 to i32
    %c0_i32_16 = arith.constant 0 : i32
    %23 = arith.cmpi ne, %22, %c0_i32_16 : i32
    scf.if %23 {
      %c0_17 = arith.constant 0 : index
      %c0_18 = arith.constant 0 : index
      %24 = vector.load %arg7[%c0_17, %c0_18] : memref<16x32xf32, #tpu.memory_space<vmem>>, vector<16x32xf32>
      %25 = arith.truncf %24 : vector<16x32xf32> to vector<16x32xbf16>
      %c0_19 = arith.constant 0 : index
      %c0_20 = arith.constant 0 : index
      %26 = vector.load %arg6[%c0_19, %c0_20] : memref<16x32xbf16, #tpu.memory_space<vmem>>, vector<16x32xbf16>
      tpu.vector_store %arg6[%c0_19, %c0_20], %25 {strides = array<i32>} : memref<16x32xbf16, #tpu.memory_space<vmem>>, vector<16x32xbf16>,
    } else {
    }
    return
  }
  func.func @transform_0(%arg0: i32, %arg1: i32) -> (i32, i32) {
    %c0_i32 = arith.constant 0 : i32
    %c0_i32_0 = arith.constant 0 : i32
    return %arg0, %c0_i32 : i32, i32
  }
  func.func @transform_1(%arg0: i32, %arg1: i32) -> (i32, i32) {
    %c0_i32 = arith.constant 0 : i32
    %c0_i32_0 = arith.constant 0 : i32
    return %arg1, %c0_i32 : i32, i32
  }
  func.func @transform_2(%arg0: i32, %arg1: i32) -> (i32, i32) {
    %c0_i32 = arith.constant 0 : i32
    %c0_i32_0 = arith.constant 0 : i32
    return %arg1, %c0_i32 : i32, i32
  }
  func.func @transform_3(%arg0: i32, %arg1: i32) -> (i32, i32) {
    %c0_i32 = arith.constant 0 : i32
    %c0_i32_0 = arith.constant 0 : i32
    return %c0_i32, %arg1 : i32, i32
  }
  func.func @transform_4(%arg0: i32, %arg1: i32) -> (i32, i32) {
    %c0_i32 = arith.constant 0 : i32
    %c0_i32_0 = arith.constant 0 : i32
    return %arg0, %c0_i32 : i32, i32
  }
}

</mosaic_0001>

<llo_original>
// kernel: tpu_custom_call.1
$region0: #{tpu_custom_call.1}
  #allocation0 [shape = 'u32[]', space=smem, size = 0x4, offset = 0x4, fixed_abs, tag = 'smem constant byte address 0x4 - core index']
  #allocation1 [shape = 'u32[144,128]{1,0:T(1,128)}', space=vmem, size = 0x12000, scoped, tag = 'internal scratch']
  #allocation2 [shape = 'f32[16,32]{1,0:T(8,128)}', space=vmem, size = 0x2000, scoped, tag = 'scratch operand']
  %s0 = inlined_call_operand.vmem [shape: bf16[16,32], index: 0, kind: input, shape index: {}]
  %s1 = inlined_call_operand.vmem [shape: bf16[64,32], index: 1, kind: input, shape index: {}]
  %s2 = inlined_call_operand.vmem [shape: bf16[64,32], index: 2, kind: input, shape index: {}]
  %s3 = inlined_call_operand.vmem [shape: bf16[32,64], index: 3, kind: input, shape index: {}]
  %s4 = inlined_call_operand.hbm [shape: bf16[16,32], index: 4, kind: output, shape index: {}]
  %s5 = sld [smem:[#allocation0]]
  $region34: #{tpu_custom_call.1} parent=0
    _
  %s7 = ssub.s32 1, %s5
  %s8 = scalar_select 0, %s7, %s5
  $region1: #{tpu_custom_call.1} parent=0
    #allocation3 [shape = 'u8[4096]{0}', space=vmem, size = 0x1000, scoped, tag = 'output window, operand 0, single buffered']
    #allocation4 [shape = 's32[1]{0}', space=sflag, size = 0x4, scoped, tag = 'scoped memory for tpu_custom_call.1']
    %9 = vsyncpa [#allocation4], 0
    // Predicated region
    $region2: #{tpu_custom_call.1} parent=1 // pred_check
      _
    $region3: #{tpu_custom_call.1} parent=1 // pred_check_branch
      %11 = sbr.rel (0) target = $region5
    $region4: #{tpu_custom_call.1} parent=1 // pred_region
      _
    $region5: #{tpu_custom_call.1} parent=1 // pred_fallthru
      _
    // Predicated region
    $region6: #{tpu_custom_call.1} parent=1 // pred_check
      _
    $region7: #{tpu_custom_call.1} parent=1 // pred_check_branch
      %13 = sbr.rel (0) target = $region9
    $region8: #{tpu_custom_call.1} parent=1 // pred_region
      _
    $region9: #{tpu_custom_call.1} parent=1 // pred_fallthru
      _
    // Predicated region
    $region10: #{tpu_custom_call.1} parent=1 // pred_check
      _
    $region11: #{tpu_custom_call.1} parent=1 // pred_check_branch
      %15 = sbr.rel (0) target = $region13
    $region12: #{tpu_custom_call.1} parent=1 // pred_region
      _
    $region13: #{tpu_custom_call.1} parent=1 // pred_fallthru
      _
    // Predicated region
    $region14: #{tpu_custom_call.1} parent=1 // pred_check
      _
    $region15: #{tpu_custom_call.1} parent=1 // pred_check_branch
      %17 = sbr.rel (0) target = $region17
    $region16: #{tpu_custom_call.1} parent=1 // pred_region
      _
    $region17: #{tpu_custom_call.1} parent=1 // pred_fallthru
      _
    %p19 = scmp.eq.s32.totalorder 0, 0
    // Predicated region
    $region18: #{tpu_custom_call.1} parent=1 // pred_check
      %p20 = pneg %p19
    $region19: #{tpu_custom_call.1} parent=1 // pred_check_branch
      %22 = sbr.rel (%p20) target = $region21
    $region20: #{tpu_custom_call.1} parent=1 // pred_region
      %vm23 = vcmask 261120
      %24 = vst.msk [vmem:[#allocation2] sm:$0xff] %vm23, 0.0
      %25 = vst.msk [vmem:[#allocation2 + $0x8] sm:$0xff] %vm23, 0.0
    $region21: #{tpu_custom_call.1} parent=1 // pred_fallthru
      _
    %v26 = vld [vmem:[%s0] sm:$0xf]
    %v27 = vld [vmem:[%s0 + $0x4] sm:$0xf]
    %v28 = vld [vmem:[%s1] sm:$0xf]
    %v29 = vld [vmem:[%s1 + $0x4] sm:$0xf]
    %v30 = vld [vmem:[%s1 + $0x8] sm:$0xf]
    %v31 = vld [vmem:[%s1 + $0xc] sm:$0xf]
    %v32 = vld [vmem:[%s1 + $0x10] sm:$0xf]
    %v33 = vld [vmem:[%s1 + $0x14] sm:$0xf]
    %v34 = vld [vmem:[%s1 + $0x18] sm:$0xf]
    %v35 = vld [vmem:[%s1 + $0x1c] sm:$0xf]
    %v38 = vunpack.c.l.b16 %v26
    %v39 = vunpack.c.l.b16 %v27
    %v40 = vpack.c.b16 %v39, %v38
    %v49 = vunpack.c.l.b16 %v28
    %v50 = vunpack.c.l.b16 %v29
    %v51 = vunpack.c.l.b16 %v30
    %v52 = vunpack.c.l.b16 %v31
    %v53 = vunpack.c.l.b16 %v32
    %v54 = vunpack.c.l.b16 %v33
    %v55 = vunpack.c.l.b16 %v34
    %v56 = vunpack.c.l.b16 %v35
    %v57 = vpack.c.b16 %v50, %v49
    %v58 = vpack.c.b16 %v52, %v51
    %v59 = vpack.c.b16 %v54, %v53
    %v60 = vpack.c.b16 %v56, %v55
    %vm61 = vcmask 261120
    %v63 = vsel %vm61, %v40, 0
    %v66 = vsel %vm61, %v57, 0
    %v69 = vsel %vm61, %v58, 0
    %v72 = vsel %vm61, %v59, 0
    %v75 = vsel %vm61, %v60, 0
    %77 = vmatprep.subr.bf16.mxu0 0
    %78 = vmatpush1.bf16.xpose.msra.mxu0 0
    %79 = vmatprep.subr.bf16.mxu0 0
    %80 = vmatpush1.bf16.xpose.msra.mxu0 0
    %81 = vmatprep.subr.bf16.mxu0 0
    %82 = vmatpush1.bf16.xpose.msra.mxu0 0
    %83 = vmatprep.subr.bf16.mxu0 0
    %84 = vmatpush1.bf16.xpose.msra.mxu0 0
    %85 = vmatprep.subr.bf16.mxu0 0
    %86 = vmatpush1.bf16.xpose.msra.mxu0 %v75
    %87 = vmatprep.subr.bf16.mxu0 0
    %88 = vmatpush1.bf16.xpose.msra.mxu0 %v72
    %89 = vmatprep.subr.bf16.mxu0 0
    %90 = vmatpush1.bf16.xpose.msra.mxu0 %v69
    %91 = vmatprep.subr.bf16.mxu0 0
    %92 = vmatpush1.bf16.xpose.msra.mxu0 %v66
    %93 = vmatprep.subr.bf16.mxu0 0
    %94 = vmatpush2.bf16.xpose.msra.mxu0 0
    %95 = vmatprep.subr.bf16.mxu0 0
    %96 = vmatpush2.bf16.xpose.msra.mxu0 0
    %97 = vmatprep.subr.bf16.mxu0 0
    %98 = vmatpush2.bf16.xpose.msra.mxu0 0
    %99 = vmatprep.subr.bf16.mxu0 0
    %100 = vmatpush2.bf16.xpose.msra.mxu0 0
    %101 = vmatprep.subr.bf16.mxu0 0
    %102 = vmatpush2.bf16.xpose.msra.mxu0 0
    %103 = vmatprep.subr.bf16.mxu0 0
    %104 = vmatpush2.bf16.xpose.msra.mxu0 0
    %105 = vmatprep.subr.bf16.mxu0 0
    %106 = vmatpush2.bf16.xpose.msra.mxu0 0
    %107 = vmatprep.subr.bf16.mxu0 0
    %108 = vmatpush2.bf16.xpose.msra.mxu0 0
    %109 = vmatprep.mubr.bf16.mxu0 0
    %110 = vmatmul.mubr.bf16.gmra.mxu0 %v63
    %v111 = vpop.f32.mrf.mxu0
    %v112 = vadd.f32 0.0, %v111
    %v113 = vpop.f32.mrf.mxu0
    %v114 = vpop.f32.mrf.mxu0
    %v115 = vadd.f32 0.0, %v114
    %v116 = vpop.f32.mrf.mxu0
    %117 = vdwg.mxu0
    %v118 = vld [vmem:[%s2] sm:$0xf]
    %v119 = vld [vmem:[%s2 + $0x4] sm:$0xf]
    %v120 = vld [vmem:[%s2 + $0x8] sm:$0xf]
    %v121 = vld [vmem:[%s2 + $0xc] sm:$0xf]
    %v122 = vld [vmem:[%s2 + $0x10] sm:$0xf]
    %v123 = vld [vmem:[%s2 + $0x14] sm:$0xf]
    %v124 = vld [vmem:[%s2 + $0x18] sm:$0xf]
    %v125 = vld [vmem:[%s2 + $0x1c] sm:$0xf]
    %v134 = vunpack.c.l.b16 %v118
    %v135 = vunpack.c.l.b16 %v119
    %v136 = vunpack.c.l.b16 %v120
    %v137 = vunpack.c.l.b16 %v121
    %v138 = vunpack.c.l.b16 %v122
    %v139 = vunpack.c.l.b16 %v123
    %v140 = vunpack.c.l.b16 %v124
    %v141 = vunpack.c.l.b16 %v125
    %v142 = vpack.c.b16 %v135, %v134
    %v143 = vpack.c.b16 %v137, %v136
    %v144 = vpack.c.b16 %v139, %v138
    %v145 = vpack.c.b16 %v141, %v140
    %v147 = vsel %vm61, %v142, 0
    %v150 = vsel %vm61, %v143, 0
    %v153 = vsel %vm61, %v144, 0
    %v156 = vsel %vm61, %v145, 0
    %158 = vmatprep.subr.bf16.mxu0 0
    %159 = vmatpush1.bf16.xpose.msra.mxu0 0
    %160 = vmatprep.subr.bf16.mxu0 0
    %161 = vmatpush1.bf16.xpose.msra.mxu0 0
    %162 = vmatprep.subr.bf16.mxu0 0
    %163 = vmatpush1.bf16.xpose.msra.mxu0 0
    %164 = vmatprep.subr.bf16.mxu0 0
    %165 = vmatpush1.bf16.xpose.msra.mxu0 0
    %166 = vmatprep.subr.bf16.mxu0 0
    %167 = vmatpush1.bf16.xpose.msra.mxu0 %v156
    %168 = vmatprep.subr.bf16.mxu0 0
    %169 = vmatpush1.bf16.xpose.msra.mxu0 %v153
    %170 = vmatprep.subr.bf16.mxu0 0
    %171 = vmatpush1.bf16.xpose.msra.mxu0 %v150
    %172 = vmatprep.subr.bf16.mxu0 0
    %173 = vmatpush1.bf16.xpose.msra.mxu0 %v147
    %174 = vmatprep.subr.bf16.mxu0 0
    %175 = vmatpush2.bf16.xpose.msra.mxu0 0
    %176 = vmatprep.subr.bf16.mxu0 0
    %177 = vmatpush2.bf16.xpose.msra.mxu0 0
    %178 = vmatprep.subr.bf16.mxu0 0
    %179 = vmatpush2.bf16.xpose.msra.mxu0 0
    %180 = vmatprep.subr.bf16.mxu0 0
    %181 = vmatpush2.bf16.xpose.msra.mxu0 0
    %182 = vmatprep.subr.bf16.mxu0 0
    %183 = vmatpush2.bf16.xpose.msra.mxu0 0
    %184 = vmatprep.subr.bf16.mxu0 0
    %185 = vmatpush2.bf16.xpose.msra.mxu0 0
    %186 = vmatprep.subr.bf16.mxu0 0
    %187 = vmatpush2.bf16.xpose.msra.mxu0 0
    %188 = vmatprep.subr.bf16.mxu0 0
    %189 = vmatpush2.bf16.xpose.msra.mxu0 0
    %190 = vmatprep.mubr.bf16.mxu0 0
    %191 = vmatmul.mubr.bf16.gmra.mxu0 %v63
    %v192 = vpop.f32.mrf.mxu0
    %v193 = vadd.f32 0.0, %v192
    %v194 = vpop.f32.mrf.mxu0
    %v195 = vpop.f32.mrf.mxu0
    %v196 = vadd.f32 0.0, %v195
    %v197 = vpop.f32.mrf.mxu0
    %198 = vdwg.mxu0
    %v199 = vxor.u32 %v112, 2147483648
    %v200 = vxor.u32 %v115, 2147483648
    %v201 = vmul.f32 %v199, 1.442695
    %v202 = vpow.pop %v201
    %v203 = vmul.f32 %v200, 1.442695
    %v204 = vpow.pop %v203
    %v205 = vadd.f32 %v202, 1.0
    %v206 = vadd.f32 %v204, 1.0
    %v207 = vrcp.pop %v205
    %v208 = vmul.f32 1.0, %v207
    %v209 = vrcp.pop %v206
    %v210 = vmul.f32 1.0, %v209
    %v211 = vmul.f32 %v112, %v208
    %v212 = vmul.f32 %v115, %v210
    %v213 = vmul.f32 %v211, %v193
    %v214 = vmul.f32 %v212, %v196
    %v215 = vld [vmem:[#allocation2] sm:$0xff]
    %v216 = vld [vmem:[#allocation2 + $0x8] sm:$0xff]
    %v217 = vpack.c.bf16 %v214, %v213
    %v218 = vld [vmem:[%s3] sm:$0xf]
    %v219 = vld [vmem:[%s3 + $0x4] sm:$0xf]
    %v220 = vld [vmem:[%s3 + $0x8] sm:$0xf]
    %v221 = vld [vmem:[%s3 + $0xc] sm:$0xf]
    %v226 = vunpack.c.l.b16 %v218
    %v227 = vunpack.c.l.b16 %v219
    %v228 = vunpack.c.l.b16 %v220
    %v229 = vunpack.c.l.b16 %v221
    %v230 = vpack.c.b16 %v227, %v226
    %v231 = vpack.c.b16 %v229, %v228
    %vm232 = vcmask 523264
    %v234 = vsel %vm232, %v217, 0
    %v237 = vsel %vm232, %v230, 0
    %v240 = vsel %vm232, %v231, 0
    %242 = vmatprep.subr.bf16.mxu0 0
    %243 = vmatpush1.bf16.xpose.msra.mxu0 0
    %244 = vmatprep.subr.bf16.mxu0 0
    %245 = vmatpush1.bf16.xpose.msra.mxu0 0
    %246 = vmatprep.subr.bf16.mxu0 0
    %247 = vmatpush1.bf16.xpose.msra.mxu0 0
    %248 = vmatprep.subr.bf16.mxu0 0
    %249 = vmatpush1.bf16.xpose.msra.mxu0 0
    %250 = vmatprep.subr.bf16.mxu0 0
    %251 = vmatpush1.bf16.xpose.msra.mxu0 0
    %252 = vmatprep.subr.bf16.mxu0 0
    %253 = vmatpush1.bf16.xpose.msra.mxu0 0
    %254 = vmatprep.subr.bf16.mxu0 0
    %255 = vmatpush1.bf16.xpose.msra.mxu0 %v240
    %256 = vmatprep.subr.bf16.mxu0 0
    %257 = vmatpush1.bf16.xpose.msra.mxu0 %v237
    %258 = vmatprep.subr.bf16.mxu0 0
    %259 = vmatpush2.bf16.xpose.msra.mxu0 0
    %260 = vmatprep.subr.bf16.mxu0 0
    %261 = vmatpush2.bf16.xpose.msra.mxu0 0
    %262 = vmatprep.subr.bf16.mxu0 0
    %263 = vmatpush2.bf16.xpose.msra.mxu0 0
    %264 = vmatprep.subr.bf16.mxu0 0
    %265 = vmatpush2.bf16.xpose.msra.mxu0 0
    %266 = vmatprep.subr.bf16.mxu0 0
    %267 = vmatpush2.bf16.xpose.msra.mxu0 0
    %268 = vmatprep.subr.bf16.mxu0 0
    %269 = vmatpush2.bf16.xpose.msra.mxu0 0
    %270 = vmatprep.subr.bf16.mxu0 0
    %271 = vmatpush2.bf16.xpose.msra.mxu0 0
    %272 = vmatprep.subr.bf16.mxu0 0
    %273 = vmatpush2.bf16.xpose.msra.mxu0 0
    %274 = vmatprep.mubr.bf16.mxu0 0
    %275 = vmatmul.mubr.bf16.gmra.mxu0 %v234
    %v276 = vpop.f32.mrf.mxu0
    %v277 = vadd.f32 0.0, %v276
    %v278 = vpop.f32.mrf.mxu0
    %v279 = vpop.f32.mrf.mxu0
    %v280 = vadd.f32 0.0, %v279
    %v281 = vpop.f32.mrf.mxu0
    %282 = vdwg.mxu0
    %v283 = vadd.f32 %v215, %v277
    %v284 = vadd.f32 %v216, %v280
    %285 = vst.msk [vmem:[#allocation2] sm:$0xff] %vm61, %v283
    %286 = vst.msk [vmem:[#allocation2 + $0x8] sm:$0xff] %vm61, %v284
    // Predicated region
    $region22: #{tpu_custom_call.1} parent=1 // pred_check
      %p287 = pneg %p19
    $region23: #{tpu_custom_call.1} parent=1 // pred_check_branch
      %289 = sbr.rel (%p287) target = $region25
    $region24: #{tpu_custom_call.1} parent=1 // pred_region
      %v290 = vld [vmem:[#allocation2] sm:$0xff]
      %v291 = vld [vmem:[#allocation2 + $0x8] sm:$0xff]
      %v292 = vpack.c.bf16 %v291, %v290
      %v294 = vunpack.c.l.b16 %v292
      %v295 = vunpack.c.h.b16 %v292
      %v296 = vpack.c.b16 %v294, %v294
      %v297 = vpack.c.b16 %v295, %v295
      %vm300 = vcmask 257024
      %301 = vst.msk [vmem:[#allocation3] sm:$0xf] %vm300, %v296
      %302 = vst.msk [vmem:[#allocation3 + $0x4] sm:$0xf] %vm300, %v297
    $region25: #{tpu_custom_call.1} parent=1 // pred_fallthru
      _
    // Predicated region
    $region26: #{tpu_custom_call.1} parent=1 // pred_check
      _
    $region27: #{tpu_custom_call.1} parent=1 // pred_check_branch
      %304 = sbr.rel (0) target = $region29
    $region28: #{tpu_custom_call.1} parent=1 // pred_region
      %s306 = ssub.s32 128, 128
      %307 = vsyncadd [#allocation4], %s306
      %s308 = sshll.u32 [#allocation3], 4
      %s309 = int_to_ptr.vmem [resolvable:$true] %s308
      %314 = dma.vmem_to_hbm [thread:$0]  %s309, 128, %s4, [#allocation4], 64, 64, 4
    $region29: #{tpu_custom_call.1} parent=1 // pred_fallthru
      _
    // Predicated region
    $region30: #{tpu_custom_call.1} parent=1 // pred_check
      _
    $region31: #{tpu_custom_call.1} parent=1 // pred_check_branch
      %316 = sbr.rel (0) target = $region33
    $region32: #{tpu_custom_call.1} parent=1 // pred_region
      %317 = dma.done [#allocation4], 128
    $region33: #{tpu_custom_call.1} parent=1 // pred_fallthru
      _
    %318 = vsyncpa [#allocation4], 1

</llo_original>
